<compile_context>
chip_gen: v6e
topology: v6e:2x2x1
jax: 0.10.0
libtpu: 0.0.40
codegen_flags: <defaults>
</compile_context>

<pallas_src>
import functools

import jax
import jax.numpy as jnp
from jax.experimental import pallas as pl
from jax.experimental.pallas import tpu as pltpu


def _neck_kernel(x_ref, w_ref, scale_ref, shift_ref, o_ref, pooled_ref, *, inv_hw, pool):
    # x_ref:      (TN, C, HW)  native dtype    (pool=True)   OR  (TN, F)  (pool=False)
    # w_ref:      (IN, T_OUT)  fc weight block (pre-transposed)
    # scale_ref:  (1, T_OUT)   gamma / sqrt(running_var + eps)
    # shift_ref:  (1, T_OUT)   beta - scale*running_mean + scale*fc_bias   (bias folded)
    # o_ref:      (TN, T_OUT)
    # pooled_ref: (TN, IN) f32 scratch, persistent across the OUT grid axis
    j = pl.program_id(1)

    @pl.when(j == 0)
    def _():
        if pool:
            # Global average pool: lane-axis reduction (XLU), f32 accumulation fused in.
            pooled_ref[...] = jnp.sum(x_ref[...], axis=-1, dtype=jnp.float32) * inv_hw
        else:
            pooled_ref[...] = x_ref[...].astype(jnp.float32)

    # fc (bias folded into shift) -> BatchNorm1d (eval, folded affine) -> ReLU.
    # NOTE: pooled is cast to the weight dtype for the MXU; bf16 weights trade a little
    # precision for 2x MXU throughput / half the weight DMA (intentional, documented).
    y = jnp.dot(pooled_ref[...].astype(w_ref.dtype), w_ref[...],
                preferred_element_type=jnp.float32)
    y = y * scale_ref[...] + shift_ref[...]
    y = jnp.maximum(y, 0.0)
    # Dropout: identity in eval mode.
    o_ref[...] = y.astype(o_ref.dtype)


def _vmem_capacity_bytes():
    """Per-TensorCore VMEM capacity; conservative 64 MiB fallback (safe on every gen)."""
    try:
        info = pltpu.get_tpu_info()
        cap = getattr(info, "vmem_capacity_bytes", None)
        if cap:
            return int(cap)
    except Exception:
        pass
    return 64 * 1024 * 1024


def _choose_batch_tile(n, per_row_bytes, resident_bytes, budget_bytes):
    """Pick the batch tile so double-buffered tiles + resident weight block fit the budget."""
    avail = max(budget_bytes - resident_bytes, per_row_bytes)
    tn = max(1, int(avail // per_row_bytes))
    tn = min(tn, n)
    if n <= 8:
        return n                      # full-dim block satisfies the (8,128) rule trivially
    tn = max(8, (tn // 8) * 8)        # keep the output sublane dim 8-aligned when tiling
    if tn >= n and n >= 16:
        # Keep >=2 batch-grid steps so the "parallel" axis can shard across 2 TCs (v7x);
        # the extra ~0.35 us step is noise on single-TC parts.
        tn = max(8, (((n + 1) // 2) // 8) * 8)
    return tn


def relative_loc_neck(xs, params, *, with_avg_pool=True, eps=1e-5, out_dtype=None):
    """Forward pass of RelativeLocNeck. xs is a single-element list (NCHW feature map)."""
    assert len(xs) == 1
    x = xs[0]
    n, c, h, w = x.shape

    if with_avg_pool:
        x_flat = x.reshape(n, c, h * w)          # free reshape: no HBM relayout
        hw = h * w
        in_features = c
    else:
        # x.view(N, -1): features on lanes, no reduction inside the kernel.
        # TODO(synk): for realistic shapes this path also needs in_features-tiled weights.
        x_flat = x.reshape(n, c * h * w)
        hw = 1
        in_features = c * h * w

    w_mat = params["w"]                          # (in_features, out_channels), pre-transposed
    assert w_mat.shape[0] == in_features, (w_mat.shape, in_features)
    out_ch = w_mat.shape[1]
    out_dtype = out_dtype or x.dtype

    # Fold eval-mode BatchNorm1d (and the fc bias) into a per-channel scale/shift.
    gamma = params["bn_gamma"].astype(jnp.float32)
    beta = params["bn_beta"].astype(jnp.float32)
    rmean = params["bn_running_mean"].astype(jnp.float32)
    rvar = params["bn_running_var"].astype(jnp.float32)
    bias = params["b"].astype(jnp.float32)
    scale = gamma / jnp.sqrt(rvar + eps)
    shift = beta - scale * rmean + scale * bias  # fc bias folded into the BN shift

    x_itemsize = jnp.dtype(x_flat.dtype).itemsize
    w_itemsize = jnp.dtype(w_mat.dtype).itemsize
    out_itemsize = jnp.dtype(out_dtype).itemsize

    vmem_cap = _vmem_capacity_bytes()
    budget = int(vmem_cap * 0.75)                # ~48 MiB on v7x, ~96 MiB on v5e/v6e

    # --- OUT tiling: weight block (in_features, t_out) must fit ~1/3 of the budget ---
    out_128 = -(-out_ch // 128) * 128            # lane-dense output padding
    max_t = int((budget // 3) // max(2 * in_features * w_itemsize, 1))
    t_out = max(128, min(out_128, (max_t // 128) * 128))
    out_pad = -(-out_ch // t_out) * t_out
    num_out_tiles = out_pad // t_out

    def _pad_cols(a, width):
        pad = width - a.shape[-1]
        return a if pad == 0 else jnp.pad(a, [(0, 0)] * (a.ndim - 1) + [(0, pad)])

    w_p = _pad_cols(w_mat, out_pad)
    scale_p = _pad_cols(scale.reshape(1, out_ch), out_pad)
    shift_p = _pad_cols(shift.reshape(1, out_ch), out_pad)

    # --- batch tiling: double-buffered input + output rows + pooled scratch per row ---
    row_elems = int(x_flat.size // n)
    per_row = (2 * row_elems * x_itemsize        # double-buffered input tile
               + 2 * out_pad * out_itemsize      # double-buffered output tile
               + in_features * 4)                # f32 pooled scratch
    resident = (2 * in_features * t_out * w_itemsize   # double-buffered weight block
                + 2 * 2 * t_out * 4                    # scale/shift double buffers
                + (1 << 20))                           # slack
    tn = _choose_batch_tile(n, per_row, resident, budget)
    grid = (pl.cdiv(n, tn), num_out_tiles)

    vmem_needed = tn * per_row + resident + (4 << 20)
    vmem_limit = int(min(max(vmem_needed, 32 << 20), int(vmem_cap * 0.9)))

    cost = pl.CostEstimate(
        flops=2 * n * in_features * out_pad + n * row_elems,
        transcendentals=0,
        bytes_accessed=(n * row_elems * x_itemsize
                        + pl.cdiv(n, tn) * in_features * out_pad * w_itemsize
                        + n * out_pad * out_itemsize),
    )

    if with_avg_pool:
        x_spec = pl.BlockSpec((tn, in_features, hw), lambda i, j: (i, 0, 0))
    else:
        x_spec = pl.BlockSpec((tn, in_features), lambda i, j: (i, 0))

    kernel = functools.partial(_neck_kernel, inv_hw=1.0 / float(hw), pool=with_avg_pool)

    out_full = pl.pallas_call(
        kernel,
        out_shape=jax.ShapeDtypeStruct((n, out_pad), out_dtype),
        grid=grid,
        in_specs=[
            x_spec,                                                 # batch-tiled feature map
            pl.BlockSpec((in_features, t_out), lambda i, j: (0, j)),  # OUT-tiled weight
            pl.BlockSpec((1, t_out), lambda i, j: (0, j)),            # BN scale
            pl.BlockSpec((1, t_out), lambda i, j: (0, j)),            # BN shift (+fc bias)
        ],
        out_specs=pl.BlockSpec((tn, t_out), lambda i, j: (i, j)),
        scratch_shapes=[pltpu.VMEM((tn, in_features), jnp.float32)],  # pooled activations
        compiler_params=pltpu.CompilerParams(
            dimension_semantics=("parallel", "arbitrary"),
            vmem_limit_bytes=vmem_limit,
        ),
        cost_estimate=cost,
    )(x_flat, w_p, scale_p, shift_p)

    out = out_full[:, :out_ch] if out_pad != out_ch else out_full
    return [out]


def init_params(key, in_channels, out_channels, std=0.005, bias=0.1, dtype=jnp.float32):
    """Matches init_weights(init_linear='normal'): fc ~ N(0, 0.005), bias=0.1; BN gamma=1, beta=0.

    fc weight is stored pre-transposed as (in_features, out_features) so there is no
    per-call transpose/cast in the wrapper.
    """
    in_features = in_channels * 2
    w = std * jax.random.normal(key, (in_features, out_channels), jnp.float32)
    return {
        "w": w.astype(dtype),
        "b": jnp.full((out_channels,), bias, jnp.float32),
        "bn_gamma": jnp.ones((out_channels,), jnp.float32),
        "bn_beta": jnp.zeros((out_channels,), jnp.float32),
        "bn_running_mean": jnp.zeros((out_channels,), jnp.float32),
        "bn_running_var": jnp.ones((out_channels,), jnp.float32),
    }


if __name__ == "__main__":
    key = jax.random.PRNGKey(0)
    k_feat, k_param, k_bn1, k_bn2 = jax.random.split(key, 4)

    # Small shapes consistent with the module: fc expects in_channels*2 input features,
    # so the incoming feature map has 2*IN_CH channels.
    N, IN_CH, H, W = 2, 16, 8, 8
    FEAT_CH = IN_CH * 2
    OUT_CH = 32

    x = jax.random.normal(k_feat, (N, FEAT_CH, H, W), jnp.float32)
    params = init_params(k_param, IN_CH, OUT_CH)

    # Non-trivial running stats so the folded BN scale/shift path is actually exercised.
    params["bn_running_mean"] = 0.01 * jax.random.normal(k_bn1, (OUT_CH,), jnp.float32)
    params["bn_running_var"] = 1.0 + 0.1 * jax.random.uniform(k_bn2, (OUT_CH,), jnp.float32)

    result = relative_loc_neck([x], params, with_avg_pool=True)
    out = jax.block_until_ready(result[0])

    # Plain-JAX reference (same math as the PyTorch eval-mode forward).
    eps = 1e-5
    pooled_ref = jnp.mean(x, axis=(2, 3))                                    # (N, 2*IN_CH)
    y_ref = pooled_ref @ params["w"] + params["b"]
    y_ref = (y_ref - params["bn_running_mean"]) / jnp.sqrt(params["bn_running_var"] + eps)
    y_ref = y_ref * params["bn_gamma"] + params["bn_beta"]
    ref = jnp.maximum(y_ref, 0.0)                                            # dropout = identity (eval)

    assert out.shape == (N, OUT_CH)
    assert jnp.allclose(out, ref, atol=1e-5, rtol=1e-5), float(jnp.max(jnp.abs(out - ref)))

    print("KERNEL_OK")
</pallas_src>

<mosaic_0001>
module attributes {stable_mosaic.version = 11 : i64} {
  func.func @_neck_kernel(%arg0: i32, %arg1: i32, %arg2: memref<2x32x64xf32, #tpu.memory_space<vmem>>, %arg3: memref<32x128xf32, #tpu.memory_space<vmem>>, %arg4: memref<1x128xf32, #tpu.memory_space<vmem>>, %arg5: memref<1x128xf32, #tpu.memory_space<vmem>>, %arg6: memref<2x128xf32, #tpu.memory_space<vmem>>, %arg7: memref<2x32xf32, #tpu.memory_space<vmem>>) attributes {dimension_semantics = [#tpu.dimension_semantics<parallel>, #tpu.dimension_semantics<arbitrary>], iteration_bounds = array<i64: 1, 1>, scalar_prefetch = 0 : i64, scratch_operands = 1 : i64, tpu.core_type = #tpu.core_type<tc>, window_params = [{transform_indices = @transform_0, window_bounds = array<i64: 2, 32, 64>}, {transform_indices = @transform_1, window_bounds = array<i64: 32, 128>}, {transform_indices = @transform_2, window_bounds = array<i64: 1, 128>}, {transform_indices = @transform_3, window_bounds = array<i64: 1, 128>}, {transform_indices = @transform_4, window_bounds = array<i64: 2, 128>}]} {
    %c0_i32 = arith.constant 0 : i32
    %0 = arith.cmpi eq, %arg1, %c0_i32 : i32
    %1 = arith.extui %0 : i1 to i32
    %c0_i32_0 = arith.constant 0 : i32
    %2 = arith.cmpi ne, %1, %c0_i32_0 : i32
    scf.if %2 {
      %c0_11 = arith.constant 0 : index
      %c0_12 = arith.constant 0 : index
      %c0_13 = arith.constant 0 : index
      %15 = vector.load %arg2[%c0_11, %c0_12, %c0_13] : memref<2x32x64xf32, #tpu.memory_space<vmem>>, vector<2x32x64xf32>
      %cst_14 = arith.constant dense<0.000000e+00> : vector<2x32xf32>
      %16 = vector.multi_reduction <add>, %15, %cst_14 [2] : vector<2x32x64xf32> to vector<2x32xf32>
      %cst_15 = arith.constant 1.562500e-02 : f32
      %17 = vector.broadcast %cst_15 : f32 to vector<2x32xf32>
      %18 = arith.mulf %16, %17 : vector<2x32xf32>
      %c0_16 = arith.constant 0 : index
      %c0_17 = arith.constant 0 : index
      %19 = vector.load %arg7[%c0_16, %c0_17] : memref<2x32xf32, #tpu.memory_space<vmem>>, vector<2x32xf32>
      tpu.vector_store %arg7[%c0_16, %c0_17], %18 {strides = array<i32>} : memref<2x32xf32, #tpu.memory_space<vmem>>, vector<2x32xf32>,
    } else {
    }
    %c0 = arith.constant 0 : index
    %c0_1 = arith.constant 0 : index
    %3 = vector.load %arg7[%c0, %c0_1] : memref<2x32xf32, #tpu.memory_space<vmem>>, vector<2x32xf32>
    %c0_2 = arith.constant 0 : index
    %c0_3 = arith.constant 0 : index
    %4 = vector.load %arg3[%c0_2, %c0_3] : memref<32x128xf32, #tpu.memory_space<vmem>>, vector<32x128xf32>
    %cst = arith.constant dense<0.000000e+00> : vector<2x128xf32>
    %5 = tpu.matmul %3, %4, %cst {dimension_numbers = #tpu.dot_dimension_numbers<[1], [0], [0], [1], [0, 0, 1, 1], [], []>} : vector<2x32xf32>, vector<32x128xf32>, vector<2x128xf32> -> vector<2x128xf32>
    %c0_4 = arith.constant 0 : index
    %c0_5 = arith.constant 0 : index
    %6 = vector.load %arg4[%c0_4, %c0_5] : memref<1x128xf32, #tpu.memory_space<vmem>>, vector<1x128xf32>
    %7 = vector.broadcast %6 : vector<1x128xf32> to vector<2x128xf32>
    %8 = arith.mulf %5, %7 : vector<2x128xf32>
    %c0_6 = arith.constant 0 : index
    %c0_7 = arith.constant 0 : index
    %9 = vector.load %arg5[%c0_6, %c0_7] : memref<1x128xf32, #tpu.memory_space<vmem>>, vector<1x128xf32>
    %10 = vector.broadcast %9 : vector<1x128xf32> to vector<2x128xf32>
    %11 = arith.addf %8, %10 : vector<2x128xf32>
    %cst_8 = arith.constant 0.000000e+00 : f32
    %12 = vector.broadcast %cst_8 : f32 to vector<2x128xf32>
    %13 = arith.maximumf %11, %12 : vector<2x128xf32>
    %c0_9 = arith.constant 0 : index
    %c0_10 = arith.constant 0 : index
    %14 = vector.load %arg6[%c0_9, %c0_10] : memref<2x128xf32, #tpu.memory_space<vmem>>, vector<2x128xf32>
    tpu.vector_store %arg6[%c0_9, %c0_10], %13 {strides = array<i32>} : memref<2x128xf32, #tpu.memory_space<vmem>>, vector<2x128xf32>,
    return
  }
  func.func @transform_0(%arg0: i32, %arg1: i32) -> (i32, i32, i32) {
    %c0_i32 = arith.constant 0 : i32
    %c0_i32_0 = arith.constant 0 : i32
    %c0_i32_1 = arith.constant 0 : i32
    return %arg0, %c0_i32, %c0_i32_0 : i32, i32, i32
  }
  func.func @transform_1(%arg0: i32, %arg1: i32) -> (i32, i32) {
    %c0_i32 = arith.constant 0 : i32
    %c0_i32_0 = arith.constant 0 : i32
    return %c0_i32, %arg1 : i32, i32
  }
  func.func @transform_2(%arg0: i32, %arg1: i32) -> (i32, i32) {
    %c0_i32 = arith.constant 0 : i32
    %c0_i32_0 = arith.constant 0 : i32
    return %c0_i32, %arg1 : i32, i32
  }
  func.func @transform_3(%arg0: i32, %arg1: i32) -> (i32, i32) {
    %c0_i32 = arith.constant 0 : i32
    %c0_i32_0 = arith.constant 0 : i32
    return %c0_i32, %arg1 : i32, i32
  }
  func.func @transform_4(%arg0: i32, %arg1: i32) -> (i32, i32) {
    %c0_i32 = arith.constant 0 : i32
    return %arg0, %arg1 : i32, i32
  }
}

</mosaic_0001>

<llo_original>
// kernel: tpu_custom_call.1
$region0: #{tpu_custom_call.1}
  #allocation0 [shape = 'u32[]', space=smem, size = 0x4, offset = 0x4, fixed_abs, tag = 'smem constant byte address 0x4 - core index']
  #allocation1 [shape = 'u32[144,128]{1,0:T(1,128)}', space=vmem, size = 0x12000, scoped, tag = 'internal scratch']
  #allocation2 [shape = 'f32[2,32]{1,0:T(2,128)}', space=vmem, size = 0x400, scoped, tag = 'scratch operand']
  %s0 = inlined_call_operand.hbm [shape: f32[2,32,64], index: 0, kind: input, shape index: {}]
  %s1 = inlined_call_operand.hbm [shape: f32[32,128], index: 1, kind: input, shape index: {}]
  %s2 = inlined_call_operand.vmem [shape: f32[1,128], index: 2, kind: input, shape index: {}]
  %s3 = inlined_call_operand.vmem [shape: f32[1,128], index: 3, kind: input, shape index: {}]
  %s4 = inlined_call_operand.hbm [shape: f32[2,128], index: 4, kind: output, shape index: {}]
  %s5 = sld [smem:[#allocation0]]
  $region38: #{tpu_custom_call.1} parent=0
    _
  %s7 = ssub.s32 1, %s5
  %s8 = scalar_select 0, %s7, %s5
  $region1: #{tpu_custom_call.1} parent=0
    #allocation3 [shape = 'u8[32768]{0}', space=vmem, size = 0x8000, scoped, tag = 'input window, operand 0, single buffered']
    #allocation4 [shape = 's32[1]{0}', space=sflag, size = 0x4, scoped, tag = 'scoped memory for tpu_custom_call.1']
    #allocation5 [shape = 's32[1]{0}', space=sflag, size = 0x4, scoped, tag = 'scoped memory for tpu_custom_call.1']
    #allocation6 [shape = 'u8[16384]{0}', space=vmem, size = 0x4000, scoped, tag = 'input window, operand 1, single buffered']
    #allocation7 [shape = 's32[1]{0}', space=sflag, size = 0x4, scoped, tag = 'scoped memory for tpu_custom_call.1']
    #allocation8 [shape = 'u8[1024]{0}', space=vmem, size = 0x400, scoped, tag = 'output window, operand 0, single buffered']
    %9 = vsyncpa [#allocation4], 0
    %10 = vsyncpa [#allocation7], 0
    %11 = vsyncpa [#allocation5], 0
    // Predicated region
    $region2: #{tpu_custom_call.1} parent=1 // pred_check
      _
    $region3: #{tpu_custom_call.1} parent=1 // pred_check_branch
      %13 = sbr.rel (0) target = $region5
    $region4: #{tpu_custom_call.1} parent=1 // pred_region
      %s15 = ssub.s32 1024, 1024
      %16 = vsyncadd [#allocation4], %s15
      %s17 = sshll.u32 [#allocation3], 4
      %s18 = int_to_ptr.vmem [resolvable:$true] %s17
      %23 = dma.hbm_to_vmem [thread:$0]  %s0, 1024, %s18, [#allocation4], 128, 128, 8
    $region5: #{tpu_custom_call.1} parent=1 // pred_fallthru
      _
    // Predicated region
    $region6: #{tpu_custom_call.1} parent=1 // pred_check
      _
    $region7: #{tpu_custom_call.1} parent=1 // pred_check_branch
      %25 = sbr.rel (0) target = $region9
    $region8: #{tpu_custom_call.1} parent=1 // pred_region
      %s27 = ssub.s32 512, 512
      %28 = vsyncadd [#allocation7], %s27
      %s29 = sshll.u32 [#allocation6], 4
      %s30 = int_to_ptr.vmem [resolvable:$true] %s29
      %35 = dma.hbm_to_vmem [thread:$0]  %s1, 512, %s30, [#allocation7], 128, 128, 8
    $region9: #{tpu_custom_call.1} parent=1 // pred_fallthru
      _
    // Predicated region
    $region10: #{tpu_custom_call.1} parent=1 // pred_check
      _
    $region11: #{tpu_custom_call.1} parent=1 // pred_check_branch
      %37 = sbr.rel (0) target = $region13
    $region12: #{tpu_custom_call.1} parent=1 // pred_region
      _
    $region13: #{tpu_custom_call.1} parent=1 // pred_fallthru
      _
    // Predicated region
    $region14: #{tpu_custom_call.1} parent=1 // pred_check
      _
    $region15: #{tpu_custom_call.1} parent=1 // pred_check_branch
      %39 = sbr.rel (0) target = $region17
    $region16: #{tpu_custom_call.1} parent=1 // pred_region
      _
    $region17: #{tpu_custom_call.1} parent=1 // pred_fallthru
      _
    // Predicated region
    $region18: #{tpu_custom_call.1} parent=1 // pred_check
      _
    $region19: #{tpu_custom_call.1} parent=1 // pred_check_branch
      %41 = sbr.rel (0) target = $region21
    $region20: #{tpu_custom_call.1} parent=1 // pred_region
      %42 = dma.done [#allocation4], 1024
    $region21: #{tpu_custom_call.1} parent=1 // pred_fallthru
      _
    // Predicated region
    $region22: #{tpu_custom_call.1} parent=1 // pred_check
      _
    $region23: #{tpu_custom_call.1} parent=1 // pred_check_branch
      %44 = sbr.rel (0) target = $region25
    $region24: #{tpu_custom_call.1} parent=1 // pred_region
      %45 = dma.done [#allocation7], 512
    $region25: #{tpu_custom_call.1} parent=1 // pred_fallthru
      _
    %p46 = scmp.eq.s32.totalorder 0, 0
    // Predicated region
    $region26: #{tpu_custom_call.1} parent=1 // pred_check
      %p47 = pneg %p46
    $region27: #{tpu_custom_call.1} parent=1 // pred_check_branch
      %49 = sbr.rel (%p47) target = $region29
    $region28: #{tpu_custom_call.1} parent=1 // pred_region
      %v50 = vld [vmem:[#allocation3] sm:$0xff]
      %v51 = vld [vmem:[#allocation3 + $0x8] sm:$0xff]
      %v52 = vld [vmem:[#allocation3 + $0x10] sm:$0xff]
      %v53 = vld [vmem:[#allocation3 + $0x18] sm:$0xff]
      %v54 = vld [vmem:[#allocation3 + $0x20] sm:$0xff]
      %v55 = vld [vmem:[#allocation3 + $0x28] sm:$0xff]
      %v56 = vld [vmem:[#allocation3 + $0x30] sm:$0xff]
      %v57 = vld [vmem:[#allocation3 + $0x38] sm:$0xff]
      %vm58 = vcmask 523264
      %v59 = vsel %vm58, %v50, 0.0
      %60 = vadd.xlane.f32.xlu0 %v59
      %v61 = vpop.xlane.xlu0 %60
      %v62 = vsel %vm58, %v51, 0.0
      %63 = vadd.xlane.f32.xlu0 %v62
      %v64 = vpop.xlane.xlu0 %63
      %v65 = vsel %vm58, %v52, 0.0
      %66 = vadd.xlane.f32.xlu0 %v65
      %v67 = vpop.xlane.xlu0 %66
      %v68 = vsel %vm58, %v53, 0.0
      %69 = vadd.xlane.f32.xlu0 %v68
      %v70 = vpop.xlane.xlu0 %69
      %v71 = vsel %vm58, %v54, 0.0
      %72 = vadd.xlane.f32.xlu0 %v71
      %v73 = vpop.xlane.xlu0 %72
      %v74 = vsel %vm58, %v55, 0.0
      %75 = vadd.xlane.f32.xlu0 %v74
      %v76 = vpop.xlane.xlu0 %75
      %v77 = vsel %vm58, %v56, 0.0
      %78 = vadd.xlane.f32.xlu0 %v77
      %v79 = vpop.xlane.xlu0 %78
      %v80 = vsel %vm58, %v57, 0.0
      %81 = vadd.xlane.f32.xlu0 %v80
      %v82 = vpop.xlane.xlu0 %81
      %v83 = vmul.f32 %v61, 0.015625
      %v84 = vmul.f32 %v64, 0.015625
      %v85 = vmul.f32 %v67, 0.015625
      %v86 = vmul.f32 %v70, 0.015625
      %v87 = vmul.f32 %v73, 0.015625
      %v88 = vmul.f32 %v76, 0.015625
      %v89 = vmul.f32 %v79, 0.015625
      %v90 = vmul.f32 %v82, 0.015625
      %v99 = vlaneseq
      %v100 = vand.u32 %v99, 127
      %v101 = vlaneseq
      %v102 = vshrl.u32 %v101, 7
      %v103 = vsub.s32 %v100, %v102
      %v104 = vrot.slane %v83, %v103
      %v105 = vadd.s32 %v100, 4294967288
      %v106 = vlaneseq
      %v107 = vshrl.u32 %v106, 7
      %v108 = vsub.s32 %v105, %v107
      %v109 = vrot.slane %v84, %v108
      %vm110 = vcmask 130112
      %v111 = vsel %vm110, %v109, %v104
      %v112 = vadd.s32 %v100, 4294967280
      %v113 = vlaneseq
      %v114 = vshrl.u32 %v113, 7
      %v115 = vsub.s32 %v112, %v114
      %v116 = vrot.slane %v85, %v115
      %vm117 = vcmask 195712
      %v118 = vsel %vm117, %v116, %v111
      %v119 = vadd.s32 %v100, 4294967272
      %v120 = vlaneseq
      %v121 = vshrl.u32 %v120, 7
      %v122 = vsub.s32 %v119, %v121
      %v123 = vrot.slane %v86, %v122
      %vm124 = vcmask 261312
      %v125 = vsel %vm124, %v123, %v118
      %v126 = vlaneseq
      %v127 = vshrl.u32 %v126, 7
      %v128 = vsub.s32 %v100, %v127
      %v129 = vrot.slane %v87, %v128
      %v130 = vlaneseq
      %v131 = vshrl.u32 %v130, 7
      %v132 = vsub.s32 %v105, %v131
      %v133 = vrot.slane %v88, %v132
      %v134 = vsel %vm110, %v133, %v129
      %v135 = vlaneseq
      %v136 = vshrl.u32 %v135, 7
      %v137 = vsub.s32 %v112, %v136
      %v138 = vrot.slane %v89, %v137
      %v139 = vsel %vm117, %v138, %v134
      %v140 = vlaneseq
      %v141 = vshrl.u32 %v140, 7
      %v142 = vsub.s32 %v119, %v141
      %v143 = vrot.slane %v90, %v142
      %v144 = vsel %vm124, %v143, %v139
      %vm145 = vcmask 1041409
      %v146 = vsel %vm145, %v144, %v125
      %vm148 = vcmask 254976
      %149 = vst.msk [vmem:[#allocation2] sm:$0x3] %vm148, %v146
    $region29: #{tpu_custom_call.1} parent=1 // pred_fallthru
      _
    %v150 = vld [vmem:[#allocation2] sm:$0x3]
    %v151 = vld [vmem:[#allocation6] sm:$0xff]
    %v152 = vld [vmem:[#allocation6 + $0x8] sm:$0xff]
    %v153 = vld [vmem:[#allocation6 + $0x10] sm:$0xff]
    %v154 = vld [vmem:[#allocation6 + $0x18] sm:$0xff]
    %vm155 = vcmask 261120
    %v157 = vsel %vm155, %v150, 0
    %159 = vmatprep.subr.mxu0 0.0
    %160 = vmatpush1.msra.mxu0 0.0
    %161 = vmatprep.subr.mxu0 0.0
    %162 = vmatpush1.msra.mxu0 0.0
    %163 = vmatprep.subr.mxu0 0.0
    %164 = vmatpush1.msra.mxu0 0.0
    %165 = vmatprep.subr.mxu0 0.0
    %166 = vmatpush1.msra.mxu0 0.0
    %167 = vmatprep.subr.mxu0 0.0
    %168 = vmatpush1.msra.mxu0 0.0
    %169 = vmatprep.subr.mxu0 0.0
    %170 = vmatpush1.msra.mxu0 0.0
    %171 = vmatprep.subr.mxu0 0.0
    %172 = vmatpush1.msra.mxu0 0.0
    %173 = vmatprep.subr.mxu0 0.0
    %174 = vmatpush1.msra.mxu0 0.0
    %175 = vmatprep.subr.mxu0 0.0
    %176 = vmatpush1.msra.mxu0 0.0
    %177 = vmatprep.subr.mxu0 0.0
    %178 = vmatpush1.msra.mxu0 0.0
    %179 = vmatprep.subr.mxu0 0.0
    %180 = vmatpush1.msra.mxu0 0.0
    %181 = vmatprep.subr.mxu0 0.0
    %182 = vmatpush1.msra.mxu0 0.0
    %183 = vmatprep.subr.mxu0 0.0
    %184 = vmatpush1.msra.mxu0 %v154
    %185 = vmatprep.subr.mxu0 0.0
    %186 = vmatpush1.msra.mxu0 %v153
    %187 = vmatprep.subr.mxu0 0.0
    %188 = vmatpush1.msra.mxu0 %v152
    %189 = vmatprep.subr.mxu0 0.0
    %190 = vmatpush1.msra.mxu0 %v151
    %191 = vmatprep.subr.mxu0 0.0
    %192 = vmatpush2.msra.mxu0 0.0
    %193 = vmatprep.subr.mxu0 0.0
    %194 = vmatpush2.msra.mxu0 0.0
    %195 = vmatprep.subr.mxu0 0.0
    %196 = vmatpush2.msra.mxu0 0.0
    %197 = vmatprep.subr.mxu0 0.0
    %198 = vmatpush2.msra.mxu0 0.0
    %199 = vmatprep.subr.mxu0 0.0
    %200 = vmatpush2.msra.mxu0 0.0
    %201 = vmatprep.subr.mxu0 0.0
    %202 = vmatpush2.msra.mxu0 0.0
    %203 = vmatprep.subr.mxu0 0.0
    %204 = vmatpush2.msra.mxu0 0.0
    %205 = vmatprep.subr.mxu0 0.0
    %206 = vmatpush2.msra.mxu0 0.0
    %207 = vmatprep.subr.mxu0 0.0
    %208 = vmatpush2.msra.mxu0 0.0
    %209 = vmatprep.subr.mxu0 0.0
    %210 = vmatpush2.msra.mxu0 0.0
    %211 = vmatprep.subr.mxu0 0.0
    %212 = vmatpush2.msra.mxu0 0.0
    %213 = vmatprep.subr.mxu0 0.0
    %214 = vmatpush2.msra.mxu0 0.0
    %215 = vmatprep.subr.mxu0 0.0
    %216 = vmatpush2.msra.mxu0 0.0
    %217 = vmatprep.subr.mxu0 0.0
    %218 = vmatpush2.msra.mxu0 0.0
    %219 = vmatprep.subr.mxu0 0.0
    %220 = vmatpush2.msra.mxu0 0.0
    %221 = vmatprep.subr.mxu0 0.0
    %222 = vmatpush2.msra.mxu0 0.0
    %223 = vmatprep.mubr.f32.mxu0 0.0
    %224 = vmatmul.mubr.f32.gmra.mxu0 %v157
    %v225 = vpop.f32.mrf.mxu0
    %v226 = vadd.f32 0.0, %v225
    %v227 = vpop.f32.mrf.mxu0
    %228 = vdwg.mxu0
    %v229 = vld [vmem:[%s2] sm:$0x1]
    %v231 = vlaneseq
    %v232 = vshrl.u32 %v231, 7
    %v233 = vsub.s32 0, %v232
    %v234 = vrot.slane %v229, %v233
    %v236 = vmul.f32 %v226, %v234
    %v237 = vld [vmem:[%s3] sm:$0x1]
    %v239 = vlaneseq
    %v240 = vshrl.u32 %v239, 7
    %v241 = vsub.s32 0, %v240
    %v242 = vrot.slane %v237, %v241
    %v244 = vadd.f32 %v236, %v242
    %v245 = vmax.f32 %v244, 0.0
    %246 = vst [vmem:[#allocation8] sm:$0x3] %v245
    // Predicated region
    $region30: #{tpu_custom_call.1} parent=1 // pred_check
      _
    $region31: #{tpu_custom_call.1} parent=1 // pred_check_branch
      %248 = sbr.rel (0) target = $region33
    $region32: #{tpu_custom_call.1} parent=1 // pred_region
      %s250 = ssub.s32 32, 32
      %251 = vsyncadd [#allocation5], %s250
      %s253 = sshll.u32 [#allocation8], 4
      %s254 = int_to_ptr.vmem [resolvable:$true] %s253
      %256 = dma.vmem_to_hbm [thread:$0]  %s254, 32, %s4, [#allocation5]
    $region33: #{tpu_custom_call.1} parent=1 // pred_fallthru
      _
    // Predicated region
    $region34: #{tpu_custom_call.1} parent=1 // pred_check
      _
    $region35: #{tpu_custom_call.1} parent=1 // pred_check_branch
      %258 = sbr.rel (0) target = $region37
    $region36: #{tpu_custom_call.1} parent=1 // pred_region
      %259 = dma.done [#allocation5], 32
    $region37: #{tpu_custom_call.1} parent=1 // pred_fallthru
      _
    %260 = vsyncpa [#allocation4], 1
    %261 = vsyncpa [#allocation7], 1
    %262 = vsyncpa [#allocation5], 1

</llo_original>
